<compile_context>
chip_gen: v6e
topology: v6e:2x2x1
jax: 0.10.0
libtpu: 0.0.40
codegen_flags: <defaults>
</compile_context>

<pallas_src>
import jax
import jax.numpy as jnp
from jax.experimental import pallas as pl
from jax.experimental.pallas import tpu as pltpu


def _gray_mse_kernel(x_ref, y_ref, o_ref, acc_ref):
    # x_ref / y_ref: (C, tS, 128) block for (batch b, outer o, inner tile ti).
    # o_ref: (8, 128) per-(b, o) partial-sum block (resident across ti).
    # acc_ref: (tS, 128) f32 accumulator scratch (full-vreg elementwise adds).
    ti = pl.program_id(2)

    @pl.when(ti == 0)
    def _():
        acc_ref[...] = jnp.zeros_like(acc_ref)

    x = x_ref[...].astype(jnp.float32)          # (C, tS, 128)
    y = y_ref[...].astype(jnp.float32)

    # sum_c(x) - sum_c(y) == sum_c(x - y): C-1 elementwise vreg adds (VPU);
    # the channel mean's 1/C is folded into the final denominator.
    d = jnp.sum(x - y, axis=0)                  # (tS, 128)
    acc_ref[...] += d * d

    @pl.when(ti == pl.num_programs(2) - 1)
    def _():
        # One cross-lane/sublane reduce per (b, o), broadcast into the
        # lane-dense (8, 128) output block (wrapper reads element [0, 0]).
        s = jnp.sum(acc_ref[...], keepdims=True)            # (1, 1)
        o_ref[...] = jnp.broadcast_to(s, o_ref.shape).astype(o_ref.dtype)


def _choose_tiling(hw, c, itemsize, target_block_bytes=4 << 20):
    """Pick (tS, n_outer, n_inner) for (C, tS, 128) input blocks.

    tS is a multiple of 32 (so f32 / bf16 / int8 all tile without sublane
    padding); the padded spatial extent is n_outer * n_inner * tS rows of
    128 lanes.
    """
    s_raw = -(-hw // 128)                       # rows of 128 lanes needed
    bytes_per_row = c * 128 * itemsize
    ts = (target_block_bytes // bytes_per_row) // 32 * 32
    ts = max(ts, 32)
    if ts >= s_raw:
        # Whole (padded) spatial extent fits in one block per batch element.
        return -(-s_raw // 8) * 8, 1, 1
    n_blocks = -(-s_raw // ts)
    n_outer = 2 if n_blocks >= 4 else 1         # feed both v7x TensorCores
    n_inner = -(-n_blocks // n_outer)
    return ts, n_outer, n_inner


def grayscale_loss(x, y):
    """x, y: (N, C, H, W). Returns scalar f32 MSE of per-pixel channel means."""
    assert x.shape == y.shape
    n, c, h, w = x.shape
    hw = h * w

    itemsize = max(jnp.dtype(x.dtype).itemsize, jnp.dtype(y.dtype).itemsize)
    ts, n_outer, n_inner = _choose_tiling(hw, c, itemsize)
    s_total = n_outer * n_inner * ts
    hw_pad = s_total * 128

    xf = x.reshape(n, c, hw)
    yf = y.reshape(n, c, hw)
    if hw_pad != hw:
        # Pad both inputs identically with zeros: the padded diff is exactly 0
        # and contributes nothing; the real hw stays in the denominator.
        pad = ((0, 0), (0, 0), (0, hw_pad - hw))
        xf = jnp.pad(xf, pad)
        yf = jnp.pad(yf, pad)
    xf = xf.reshape(n, c, s_total, 128)
    yf = yf.reshape(n, c, s_total, 128)

    # Honest VMEM accounting: block bytes x 2 inputs x buffer depth
    # + f32 accumulator + double-buffered (8, 128) output blocks.
    block_bytes = c * ts * 128 * itemsize
    buffers = 3 if (block_bytes < (512 << 10) and n_inner >= 3) else 2
    acc_bytes = ts * 128 * 4
    footprint = 2 * buffers * block_bytes + acc_bytes + 2 * 8 * 128 * 4
    vmem_limit = int(min(max(footprint + (4 << 20), 32 << 20), 48 << 20))

    spec_kwargs = {"pipeline_mode": pl.Buffered(3)} if buffers == 3 else {}

    def make_in_spec():
        return pl.BlockSpec(
            (None, c, ts, 128),
            lambda b, o, i: (b, 0, o * n_inner + i, 0),
            **spec_kwargs,
        )

    partials = pl.pallas_call(
        _gray_mse_kernel,
        out_shape=jax.ShapeDtypeStruct((n, n_outer, 8, 128), jnp.float32),
        grid_spec=pltpu.PrefetchScalarGridSpec(
            num_scalar_prefetch=0,
            grid=(n, n_outer, n_inner),
            in_specs=[make_in_spec(), make_in_spec()],
            out_specs=pl.BlockSpec((None, None, 8, 128),
                                   lambda b, o, i: (b, o, 0, 0)),
            scratch_shapes=[pltpu.VMEM((ts, 128), jnp.float32)],
        ),
        compiler_params=pltpu.CompilerParams(
            dimension_semantics=("parallel", "parallel", "arbitrary"),
            vmem_limit_bytes=vmem_limit,
        ),
    )(xf, yf)

    # partials[b, o, 0, 0] = sum over that spatial shard of (sum_c x - sum_c y)^2.
    total = jnp.sum(partials[:, :, 0, 0])
    # MSE over the (N, 1, H, W) grayscale tensor with the channel-mean 1/C
    # folded in: divide by N * H * W * C^2.
    return total / jnp.float32(n * hw * c * c)


if __name__ == "__main__":
    key = jax.random.PRNGKey(0)
    kx, ky = jax.random.split(key)
    N, C, H, W = 2, 4, 16, 16
    x = jax.random.normal(kx, (N, C, H, W), dtype=jnp.float32)
    y = jax.random.normal(ky, (N, C, H, W), dtype=jnp.float32)

    loss = grayscale_loss(x, y)
    jax.block_until_ready(loss)

    # Pure-JAX reference check.
    ref = jnp.mean((jnp.mean(x, axis=1) - jnp.mean(y, axis=1)) ** 2)
    assert jnp.allclose(loss, ref, rtol=1e-5, atol=1e-6), (loss, ref)

    print("KERNEL_OK")
</pallas_src>

<mosaic_0001>
module attributes {stable_mosaic.version = 11 : i64} {
  func.func @_gray_mse_kernel(%arg0: i32, %arg1: i32, %arg2: i32, %arg3: memref<1x4x8x128xf32, #tpu.memory_space<vmem>>, %arg4: memref<1x4x8x128xf32, #tpu.memory_space<vmem>>, %arg5: memref<1x1x8x128xf32, #tpu.memory_space<vmem>>, %arg6: memref<8x128xf32, #tpu.memory_space<vmem>>) attributes {dimension_semantics = [#tpu.dimension_semantics<parallel>, #tpu.dimension_semantics<parallel>, #tpu.dimension_semantics<arbitrary>], iteration_bounds = array<i64: 2, 1, 1>, scalar_prefetch = 0 : i64, scratch_operands = 1 : i64, tpu.core_type = #tpu.core_type<tc>, window_params = [{transform_indices = @transform_0, window_bounds = array<i64: 1, 4, 8, 128>}, {transform_indices = @transform_1, window_bounds = array<i64: 1, 4, 8, 128>}, {transform_indices = @transform_2, window_bounds = array<i64: 1, 1, 8, 128>}]} {
    %c0_i32 = arith.constant 0 : i32
    %0 = arith.cmpi eq, %arg2, %c0_i32 : i32
    %1 = arith.extui %0 : i1 to i32
    %c0_i32_0 = arith.constant 0 : i32
    %2 = arith.cmpi ne, %1, %c0_i32_0 : i32
    scf.if %2 {
      %cst_14 = arith.constant 0.000000e+00 : f32
      %16 = vector.broadcast %cst_14 : f32 to vector<8x128xf32>
      %c0_15 = arith.constant 0 : index
      %c0_16 = arith.constant 0 : index
      %17 = vector.load %arg6[%c0_15, %c0_16] : memref<8x128xf32, #tpu.memory_space<vmem>>, vector<8x128xf32>
      tpu.vector_store %arg6[%c0_15, %c0_16], %16 {strides = array<i32>} : memref<8x128xf32, #tpu.memory_space<vmem>>, vector<8x128xf32>,
    } else {
    }
    %c0 = arith.constant 0 : index
    %c0_1 = arith.constant 0 : index
    %c0_2 = arith.constant 0 : index
    %c0_3 = arith.constant 0 : index
    %3 = vector.load %arg3[%c0, %c0_1, %c0_2, %c0_3] : memref<1x4x8x128xf32, #tpu.memory_space<vmem>>, vector<1x4x8x128xf32>
    %4 = vector.shape_cast %3 : vector<1x4x8x128xf32> to vector<4x8x128xf32>
    %c0_4 = arith.constant 0 : index
    %c0_5 = arith.constant 0 : index
    %c0_6 = arith.constant 0 : index
    %c0_7 = arith.constant 0 : index
    %5 = vector.load %arg4[%c0_4, %c0_5, %c0_6, %c0_7] : memref<1x4x8x128xf32, #tpu.memory_space<vmem>>, vector<1x4x8x128xf32>
    %6 = vector.shape_cast %5 : vector<1x4x8x128xf32> to vector<4x8x128xf32>
    %7 = arith.subf %4, %6 : vector<4x8x128xf32>
    %cst = arith.constant dense<0.000000e+00> : vector<8x128xf32>
    %8 = vector.multi_reduction <add>, %7, %cst [0] : vector<4x8x128xf32> to vector<8x128xf32>
    %c0_8 = arith.constant 0 : index
    %c0_9 = arith.constant 0 : index
    %9 = vector.load %arg6[%c0_8, %c0_9] : memref<8x128xf32, #tpu.memory_space<vmem>>, vector<8x128xf32>
    %10 = arith.mulf %8, %8 : vector<8x128xf32>
    %11 = arith.addf %9, %10 : vector<8x128xf32>
    %c0_10 = arith.constant 0 : index
    %c0_11 = arith.constant 0 : index
    %12 = vector.load %arg6[%c0_10, %c0_11] : memref<8x128xf32, #tpu.memory_space<vmem>>, vector<8x128xf32>
    tpu.vector_store %arg6[%c0_10, %c0_11], %11 {strides = array<i32>} : memref<8x128xf32, #tpu.memory_space<vmem>>, vector<8x128xf32>,
    %c0_i32_12 = arith.constant 0 : i32
    %13 = arith.cmpi eq, %arg2, %c0_i32_12 : i32
    %14 = arith.extui %13 : i1 to i32
    %c0_i32_13 = arith.constant 0 : i32
    %15 = arith.cmpi ne, %14, %c0_i32_13 : i32
    scf.if %15 {
      %c0_14 = arith.constant 0 : index
      %c0_15 = arith.constant 0 : index
      %16 = vector.load %arg6[%c0_14, %c0_15] : memref<8x128xf32, #tpu.memory_space<vmem>>, vector<8x128xf32>
      %17 = vector.shape_cast %16 : vector<8x128xf32> to vector<1x8x128xf32>
      %cst_16 = arith.constant dense<0.000000e+00> : vector<1xf32>
      %18 = vector.multi_reduction <add>, %17, %cst_16 [1, 2] : vector<1x8x128xf32> to vector<1xf32>
      %19 = vector.shape_cast %18 : vector<1xf32> to vector<1x1x1xf32>
      %20 = vector.extract %19[0, 0, 0] : f32 from vector<1x1x1xf32>
      %21 = vector.broadcast %20 : f32 to vector<1x1xf32>
      %22 = vector.shape_cast %21 : vector<1x1xf32> to vector<1x1xf32>
      %23 = vector.broadcast %22 : vector<1x1xf32> to vector<8x128xf32>
      %c0_17 = arith.constant 0 : index
      %c0_18 = arith.constant 0 : index
      %c0_19 = arith.constant 0 : index
      %c0_20 = arith.constant 0 : index
      %24 = vector.load %arg5[%c0_17, %c0_18, %c0_19, %c0_20] : memref<1x1x8x128xf32, #tpu.memory_space<vmem>>, vector<1x1x8x128xf32>
      %25 = vector.shape_cast %24 : vector<1x1x8x128xf32> to vector<8x128xf32>
      %26 = vector.shape_cast %23 : vector<8x128xf32> to vector<1x1x8x128xf32>
      tpu.vector_store %arg5[%c0_17, %c0_18, %c0_19, %c0_20], %26 {strides = array<i32>} : memref<1x1x8x128xf32, #tpu.memory_space<vmem>>, vector<1x1x8x128xf32>,
    } else {
    }
    return
  }
  func.func @transform_0(%arg0: i32, %arg1: i32, %arg2: i32) -> (i32, i32, i32, i32) {
    %c1_i32 = arith.constant 1 : i32
    %0 = arith.muli %arg1, %c1_i32 : i32
    %1 = arith.addi %0, %arg2 : i32
    %c0_i32 = arith.constant 0 : i32
    %c0_i32_0 = arith.constant 0 : i32
    %c0_i32_1 = arith.constant 0 : i32
    return %arg0, %c0_i32, %1, %c0_i32_0 : i32, i32, i32, i32
  }
  func.func @transform_1(%arg0: i32, %arg1: i32, %arg2: i32) -> (i32, i32, i32, i32) {
    %c1_i32 = arith.constant 1 : i32
    %0 = arith.muli %arg1, %c1_i32 : i32
    %1 = arith.addi %0, %arg2 : i32
    %c0_i32 = arith.constant 0 : i32
    %c0_i32_0 = arith.constant 0 : i32
    %c0_i32_1 = arith.constant 0 : i32
    return %arg0, %c0_i32, %1, %c0_i32_0 : i32, i32, i32, i32
  }
  func.func @transform_2(%arg0: i32, %arg1: i32, %arg2: i32) -> (i32, i32, i32, i32) {
    %c0_i32 = arith.constant 0 : i32
    %c0_i32_0 = arith.constant 0 : i32
    %c0_i32_1 = arith.constant 0 : i32
    return %arg0, %arg1, %c0_i32, %c0_i32_0 : i32, i32, i32, i32
  }
}

</mosaic_0001>

<llo_original>
// kernel: tpu_custom_call.1
$region0: #{tpu_custom_call.1}
  #allocation0 [shape = 'u32[]', space=smem, size = 0x4, offset = 0x4, fixed_abs, tag = 'smem constant byte address 0x4 - core index']
  #allocation1 [shape = 'u32[144,128]{1,0:T(1,128)}', space=vmem, size = 0x12000, scoped, tag = 'internal scratch']
  #allocation2 [shape = 'f32[8,128]{1,0:T(8,128)}', space=vmem, size = 0x1000, scoped, tag = 'scratch operand']
  %s0 = inlined_call_operand.hbm [shape: f32[2,4,8,128], index: 0, kind: input, shape index: {}]
  %s1 = inlined_call_operand.hbm [shape: f32[2,4,8,128], index: 1, kind: input, shape index: {}]
  %s2 = inlined_call_operand.hbm [shape: f32[2,1,8,128], index: 2, kind: output, shape index: {}]
  %s3 = sld [smem:[#allocation0]]
  $region57: #{tpu_custom_call.1} parent=0
    _
  %s5 = ssub.s32 1, %s3
  %s6 = scalar_select 0, %s5, %s3
  $region1: #{tpu_custom_call.1} parent=0
    #allocation3 [shape = 'u8[32768]{0}', space=vmem, size = 0x8000, scoped, tag = 'input window, operand 0']
    #allocation4 [shape = 's32[2]{0}', space=sflag, size = 0x8, scoped, tag = 'scoped memory for tpu_custom_call.1']
    #allocation5 [shape = 's32[2]{0}', space=sflag, size = 0x8, scoped, tag = 'scoped memory for tpu_custom_call.1']
    #allocation6 [shape = 'u8[32768]{0}', space=vmem, size = 0x8000, scoped, tag = 'input window, operand 1']
    #allocation7 [shape = 's32[2]{0}', space=sflag, size = 0x8, scoped, tag = 'scoped memory for tpu_custom_call.1']
    #allocation8 [shape = 'u8[8192]{0}', space=vmem, size = 0x2000, scoped, tag = 'output window, operand 0']
    %7 = vsyncpa [#allocation4], 0
    %s8 = scalar_lea.sflag [#allocation4], 1
    %9 = vsyncpa %s8, 0
    %10 = vsyncpa [#allocation7], 0
    %s11 = scalar_lea.sflag [#allocation7], 1
    %12 = vsyncpa %s11, 0
    %13 = vsyncpa [#allocation5], 0
    %s14 = scalar_lea.sflag [#allocation5], 1
    %15 = vsyncpa %s14, 0
    loop: start=0, step=1, limit=4
    $region2: #{tpu_custom_call.1} parent=1 // loop_pre_header
      _
    $region3: #{tpu_custom_call.1} parent=1 // loop_header
      %s17 = sphi 0, %s21
      %p18 = scmp.ge.s32.totalorder %s17, 4
      %s24 = sphi 0, %s43
      %s25 = sphi 0, %s39
      %s26 = sphi 0, %s35
      %s27 = sphi 0, %s24
      %s28 = sphi 0, %s25
      %s29 = sphi 0, %s26
      %s30 = sphi 0, %s27
      %s31 = sphi 0, %s28
      %s32 = sphi 0, %s29
      %s50 = sphi 0, %s52
      %s53 = sphi 0, %s50
      %s54 = sphi 0, %s53
      %s70 = sphi 0, %s54
      %s80 = sphi 0, %s82
      %s83 = sphi 0, %s80
      %s84 = sphi 0, %s83
      %s100 = sphi 0, %s84
      %s108 = sphi 0, %s110
      %s111 = sphi 0, %s108
      %s112 = sphi 0, %s111
      %s128 = sphi 0, %s112
    $region4: #{tpu_custom_call.1} parent=1 // loop_header_branch
      %20 = sbr.rel (%p18) target = $region8
    $region5: #{tpu_custom_call.1} parent=1 // loop_body
      %s22 = ssub.s32 %s17, 1
      %s23 = ssub.s32 %s17, 2
      %s33 = sadd.s32 1, %s26
      %p34 = scmp.ge.s32.totalorder %s33, 1
      %s35 = scalar_select %p34, 0, %s33
      %s36 = sadd.s32 1, %s25
      %s37 = scalar_select %p34, %s36, %s25
      %p38 = scmp.ge.s32.totalorder %s37, 1
      %s39 = scalar_select %p38, 0, %s37
      %s40 = sadd.s32 1, %s24
      %s41 = scalar_select %p38, %s40, %s24
      %p42 = scmp.ge.s32.totalorder %s41, 2
      %s43 = scalar_select %p42, 0, %s41
      %s44 = sadd.s32 %s25, %s26
      %s45 = sadd.s32 %s39, %s35
      %s46 = ssub.s32 %s24, %s43
      %s47 = ssub.s32 %s44, %s45
      %s48 = sor.u32 %s46, %s47
      %p49 = scmp.eq.s32.totalorder %s48, 0
      %s51 = sadd.s32 %s50, 1
      %s52 = scalar_select %p49, %s50, %s51
      %p55 = pneg %p49
      %p56 = scmp.eq.s32.totalorder %s17, 1
      %p57 = por %p55, %p56
      %p58 = scmp.ne.s32.totalorder %s50, %s53
      %p59 = scmp.eq.s32.totalorder %s17, 0
      %p60 = por %p58, %p59
      %p61 = scmp.ne.s32.totalorder %s50, %s53
      %p62 = scmp.eq.s32.totalorder %s22, 1
      %p63 = por %p61, %p62
      %p64 = scmp.ne.s32.totalorder %s53, %s54
      %p65 = scmp.eq.s32.totalorder %s22, 0
      %p66 = por %p64, %p65
      %p67 = scmp.ne.s32.totalorder %s53, %s54
      %p68 = scmp.eq.s32.totalorder %s23, 1
      %p69 = por %p67, %p68
      %p71 = scmp.ne.s32.totalorder %s54, %s70
      %p72 = scmp.eq.s32.totalorder %s23, 0
      %p73 = por %p71, %p72
      %s74 = sadd.s32 %s25, %s26
      %s75 = sadd.s32 %s39, %s35
      %s76 = ssub.s32 %s24, %s43
      %s77 = ssub.s32 %s74, %s75
      %s78 = sor.u32 %s76, %s77
      %p79 = scmp.eq.s32.totalorder %s78, 0
      %s81 = sadd.s32 %s80, 1
      %s82 = scalar_select %p79, %s80, %s81
      %p85 = pneg %p79
      %p86 = scmp.eq.s32.totalorder %s17, 1
      %p87 = por %p85, %p86
      %p88 = scmp.ne.s32.totalorder %s80, %s83
      %p89 = scmp.eq.s32.totalorder %s17, 0
      %p90 = por %p88, %p89
      %p91 = scmp.ne.s32.totalorder %s80, %s83
      %p92 = scmp.eq.s32.totalorder %s22, 1
      %p93 = por %p91, %p92
      %p94 = scmp.ne.s32.totalorder %s83, %s84
      %p95 = scmp.eq.s32.totalorder %s22, 0
      %p96 = por %p94, %p95
      %p97 = scmp.ne.s32.totalorder %s83, %s84
      %p98 = scmp.eq.s32.totalorder %s23, 1
      %p99 = por %p97, %p98
      %p101 = scmp.ne.s32.totalorder %s84, %s100
      %p102 = scmp.eq.s32.totalorder %s23, 0
      %p103 = por %p101, %p102
      %s104 = ssub.s32 %s24, %s43
      %s105 = ssub.s32 %s25, %s39
      %s106 = sor.u32 %s104, %s105
      %p107 = scmp.eq.s32.totalorder %s106, 0
      %s109 = sadd.s32 %s108, 1
      %s110 = scalar_select %p107, %s108, %s109
      %p113 = pneg %p107
      %p114 = scmp.eq.s32.totalorder %s17, 1
      %p115 = por %p113, %p114
      %p116 = scmp.ne.s32.totalorder %s108, %s111
      %p117 = scmp.eq.s32.totalorder %s17, 0
      %p118 = por %p116, %p117
      %p119 = scmp.ne.s32.totalorder %s108, %s111
      %p120 = scmp.eq.s32.totalorder %s22, 1
      %p121 = por %p119, %p120
      %p122 = scmp.ne.s32.totalorder %s111, %s112
      %p123 = scmp.eq.s32.totalorder %s22, 0
      %p124 = por %p122, %p123
      %p125 = scmp.ne.s32.totalorder %s111, %s112
      %p126 = scmp.eq.s32.totalorder %s23, 1
      %p127 = por %p125, %p126
      %p129 = scmp.ne.s32.totalorder %s112, %s128
      %p130 = scmp.eq.s32.totalorder %s23, 0
      %p131 = por %p129, %p130
      %p132 = scmp.le.s32.totalorder 1, %s17
      %p133 = scmp.lt.s32.totalorder %s17, 3
      %p134 = pnand %p132, %p133
      %p135 = pneg %p134
      // Predicated region
      $region9: #{tpu_custom_call.1} parent=5 // pred_check
        _
      $region10: #{tpu_custom_call.1} parent=5 // pred_check_branch
        %137 = sbr.rel (%p134) target = $region12
      $region11: #{tpu_custom_call.1} parent=5 // pred_region
        %s138 = ssub.s32 %s17, 1
      $region12: #{tpu_custom_call.1} parent=5 // pred_fallthru
        _
      %p139 = scmp.lt.s32.totalorder %s17, 2
      // Predicated region
      $region13: #{tpu_custom_call.1} parent=5 // pred_check
        %p140 = pneg %p139
      $region14: #{tpu_custom_call.1} parent=5 // pred_check_branch
        %142 = sbr.rel (%p140) target = $region16
      $region15: #{tpu_custom_call.1} parent=5 // pred_region
        // Predicated region
        $region17: #{tpu_custom_call.1} parent=15 // pred_check
          %p143 = pneg %p60
        $region18: #{tpu_custom_call.1} parent=15 // pred_check_branch
          %145 = sbr.rel (%p143) target = $region20
        $region19: #{tpu_custom_call.1} parent=15 // pred_region
          %s146 = sand.u32 %s50, 1
          %s147 = scalar_lea.sflag [#allocation4], %s146
          %s148 = sand.u32 %s50, 1
          %s149 = smul.addr %s148, 32
          %s150 = scalar_lea.vmem [#allocation3], %s149
          %s151 = sadd.s32 %s25, %s26
          %s153 = ssub.s32 512, 512
          %154 = vsyncadd %s147, %s153
          %s155 = smul.addr %s24, 4
          %s156 = sadd.s32 %s151, %s155
          %s157 = smul.addr %s156, 128
          %s158 = scalar_lea.hbm %s0, %s157
          %s159 = sshll.u32 %s150, 4
          %s160 = int_to_ptr.vmem [resolvable:$true] %s159
          %165 = dma.hbm_to_vmem [thread:$0]  %s158, 512, %s160, %s147, 128, 128, 8
        $region20: #{tpu_custom_call.1} parent=15 // pred_fallthru
          _
        // Predicated region
        $region21: #{tpu_custom_call.1} parent=15 // pred_check
          %p166 = pneg %p90
        $region22: #{tpu_custom_call.1} parent=15 // pred_check_branch
          %168 = sbr.rel (%p166) target = $region24
        $region23: #{tpu_custom_call.1} parent=15 // pred_region
          %s169 = sand.u32 %s80, 1
          %s170 = scalar_lea.sflag [#allocation7], %s169
          %s171 = sand.u32 %s80, 1
          %s172 = smul.addr %s171, 32
          %s173 = scalar_lea.vmem [#allocation6], %s172
          %s174 = sadd.s32 %s25, %s26
          %s176 = ssub.s32 512, 512
          %177 = vsyncadd %s170, %s176
          %s178 = smul.addr %s24, 4
          %s179 = sadd.s32 %s174, %s178
          %s180 = smul.addr %s179, 128
          %s181 = scalar_lea.hbm %s1, %s180
          %s182 = sshll.u32 %s173, 4
          %s183 = int_to_ptr.vmem [resolvable:$true] %s182
          %188 = dma.hbm_to_vmem [thread:$0]  %s181, 512, %s183, %s170, 128, 128, 8
        $region24: #{tpu_custom_call.1} parent=15 // pred_fallthru
          _
      $region16: #{tpu_custom_call.1} parent=5 // pred_fallthru
        _
      %p189 = scmp.le.s32.totalorder 1, %s17
      %p190 = scmp.lt.s32.totalorder %s17, 3
      %p191 = pnand %p189, %p190
      %p192 = pneg %p191
      // Predicated region
      $region25: #{tpu_custom_call.1} parent=5 // pred_check
        _
      $region26: #{tpu_custom_call.1} parent=5 // pred_check_branch
        %194 = sbr.rel (%p191) target = $region28
      $region27: #{tpu_custom_call.1} parent=5 // pred_region
        %s195 = ssub.s32 %s17, 1
        %s196 = sand.u32 %s53, 1
        %s197 = scalar_lea.sflag [#allocation4], %s196
        %s198 = sand.u32 %s53, 1
        %s199 = smul.addr %s198, 32
        %s200 = scalar_lea.vmem [#allocation3], %s199
        // Predicated region
        $region29: #{tpu_custom_call.1} parent=27 // pred_check
          %p201 = pneg %p66
        $region30: #{tpu_custom_call.1} parent=27 // pred_check_branch
          %203 = sbr.rel (%p201) target = $region32
        $region31: #{tpu_custom_call.1} parent=27 // pred_region
          %204 = dma.done %s197, 512
        $region32: #{tpu_custom_call.1} parent=27 // pred_fallthru
          _
        %s205 = sand.u32 %s83, 1
        %s206 = scalar_lea.sflag [#allocation7], %s205
        %s207 = sand.u32 %s83, 1
        %s208 = smul.addr %s207, 32
        %s209 = scalar_lea.vmem [#allocation6], %s208
        // Predicated region
        $region33: #{tpu_custom_call.1} parent=27 // pred_check
          %p210 = pneg %p96
        $region34: #{tpu_custom_call.1} parent=27 // pred_check_branch
          %212 = sbr.rel (%p210) target = $region36
        $region35: #{tpu_custom_call.1} parent=27 // pred_region
          %213 = dma.done %s206, 512
        $region36: #{tpu_custom_call.1} parent=27 // pred_fallthru
          _
        %s214 = sand.u32 %s53, 1
        %s215 = scalar_lea.sflag [#allocation4], %s214
        %s216 = sand.u32 %s53, 1
        %s217 = smul.addr %s216, 32
        %s218 = scalar_lea.vmem [#allocation3], %s217
        %p219 = pneg %p66
        %p220 = pneg %p63
        %s221 = sand.u32 %s83, 1
        %s222 = scalar_lea.sflag [#allocation7], %s221
        %s223 = sand.u32 %s83, 1
        %s224 = smul.addr %s223, 32
        %s225 = scalar_lea.vmem [#allocation6], %s224
        %p226 = pneg %p96
        %p227 = pneg %p93
        %p228 = pneg %p124
        %p229 = pneg %p121
        %s230 = sand.u32 %s111, 1
        %s231 = scalar_lea.sflag [#allocation5], %s230
        %s232 = sand.u32 %s111, 1
        %s233 = smul.addr %s232, 8
        %s234 = scalar_lea.vmem [#allocation8], %s233
        %s235 = sadd.s32 %s28, %s29
        %s236 = sadd.s32 %s28, %s29
        %p237 = scmp.eq.s32.totalorder %s29, 0
        // Predicated region
        $region37: #{tpu_custom_call.1} parent=27 // pred_check
          %p238 = pneg %p237
        $region38: #{tpu_custom_call.1} parent=27 // pred_check_branch
          %240 = sbr.rel (%p238) target = $region40
        $region39: #{tpu_custom_call.1} parent=27 // pred_region
          %241 = vst [vmem:[#allocation2] sm:$0xff] 0.0
        $region40: #{tpu_custom_call.1} parent=27 // pred_fallthru
          _
        %v242 = vld [vmem:[%s200] sm:$0xff]
        %v243 = vld [vmem:[%s200 + $0x8] sm:$0xff]
        %v244 = vld [vmem:[%s200 + $0x10] sm:$0xff]
        %v245 = vld [vmem:[%s200 + $0x18] sm:$0xff]
        %v246 = vld [vmem:[%s209] sm:$0xff]
        %v247 = vld [vmem:[%s209 + $0x8] sm:$0xff]
        %v248 = vld [vmem:[%s209 + $0x10] sm:$0xff]
        %v249 = vld [vmem:[%s209 + $0x18] sm:$0xff]
        %v250 = vsub.f32 %v242, %v246
        %v251 = vsub.f32 %v243, %v247
        %v252 = vsub.f32 %v244, %v248
        %v253 = vsub.f32 %v245, %v249
        %v254 = vadd.f32 %v250, %v251
        %v255 = vadd.f32 %v254, %v252
        %v256 = vadd.f32 %v255, %v253
        %v257 = vld [vmem:[#allocation2] sm:$0xff]
        %v258 = vmul.f32 %v256, %v256
        %v259 = vadd.f32 %v257, %v258
        %260 = vst [vmem:[#allocation2] sm:$0xff] %v259
        // Predicated region
        $region41: #{tpu_custom_call.1} parent=27 // pred_check
          %p261 = pneg %p237
        $region42: #{tpu_custom_call.1} parent=27 // pred_check_branch
          %263 = sbr.rel (%p261) target = $region44
        $region43: #{tpu_custom_call.1} parent=27 // pred_region
          %v264 = vld [vmem:[#allocation2] sm:$0xff]
          %265 = vadd.xlane.f32.xlu0 %v264
          %v266 = vpop.xlane.xlu0 %265
          %v267 = vrot.slane %v266, 4
          %v268 = vadd.f32 %v266, %v267
          %v269 = vrot.slane %v268, 2
          %v270 = vadd.f32 %v268, %v269
          %v271 = vrot.slane %v270, 1
          %v272 = vadd.f32 %v270, %v271
          %s273 = vtos %v272
          %v274 = vstv %s273
          %275 = vst [vmem:[%s234] sm:$0xff] %v274
        $region44: #{tpu_custom_call.1} parent=27 // pred_fallthru
          _
        %s276 = sand.u32 %s111, 1
        %s277 = scalar_lea.sflag [#allocation5], %s276
        %s278 = sand.u32 %s111, 1
        %s279 = smul.addr %s278, 8
        %s280 = scalar_lea.vmem [#allocation8], %s279
        // Predicated region
        $region45: #{tpu_custom_call.1} parent=27 // pred_check
          %p281 = pneg %p121
        $region46: #{tpu_custom_call.1} parent=27 // pred_check_branch
          %283 = sbr.rel (%p281) target = $region48
        $region47: #{tpu_custom_call.1} parent=27 // pred_region
          %s285 = ssub.s32 128, 128
          %286 = vsyncadd %s277, %s285
          %s287 = sadd.s32 %s28, %s27
          %s288 = smul.addr %s287, 128
          %s289 = scalar_lea.hbm %s2, %s288
          %s291 = sshll.u32 %s280, 4
          %s292 = int_to_ptr.vmem [resolvable:$true] %s291
          %294 = dma.vmem_to_hbm [thread:$0]  %s292, 128, %s289, %s277
        $region48: #{tpu_custom_call.1} parent=27 // pred_fallthru
          _
      $region28: #{tpu_custom_call.1} parent=5 // pred_fallthru
        _
      %p295 = scmp.le.s32.totalorder 2, %s17
      // Predicated region
      $region49: #{tpu_custom_call.1} parent=5 // pred_check
        %p296 = pneg %p295
      $region50: #{tpu_custom_call.1} parent=5 // pred_check_branch
        %298 = sbr.rel (%p296) target = $region52
      $region51: #{tpu_custom_call.1} parent=5 // pred_region
        %s299 = ssub.s32 %s17, 2
        // Predicated region
        $region53: #{tpu_custom_call.1} parent=51 // pred_check
          %p300 = pneg %p127
        $region54: #{tpu_custom_call.1} parent=51 // pred_check_branch
          %302 = sbr.rel (%p300) target = $region56
        $region55: #{tpu_custom_call.1} parent=51 // pred_region
          %s303 = sand.u32 %s112, 1
          %s304 = scalar_lea.sflag [#allocation5], %s303
          %s305 = sand.u32 %s112, 1
          %s306 = smul.addr %s305, 8
          %s307 = scalar_lea.vmem [#allocation8], %s306
          %308 = dma.done %s304, 128
        $region56: #{tpu_custom_call.1} parent=51 // pred_fallthru
          _
      $region52: #{tpu_custom_call.1} parent=5 // pred_fallthru
        _
    $region6: #{tpu_custom_call.1} parent=1 // loop_footer
      %s21 = sadd.s32 1, %s17
    $region7: #{tpu_custom_call.1} parent=1 // loop_footer_branch
      %16 = sbr.rel target = $region3
    $region8: #{tpu_custom_call.1} parent=1 // loop_exit
      _
    %309 = vsyncpa [#allocation4], 1
    %s310 = scalar_lea.sflag [#allocation4], 1
    %311 = vsyncpa %s310, 1
    %312 = vsyncpa [#allocation7], 1
    %s313 = scalar_lea.sflag [#allocation7], 1
    %314 = vsyncpa %s313, 1
    %315 = vsyncpa [#allocation5], 1
    %s316 = scalar_lea.sflag [#allocation5], 1
    %317 = vsyncpa %s316, 1

</llo_original>
